<compile_context>
chip_gen: v5e
topology: v5e:2x2
jax: 0.10.0
libtpu: 0.0.40
codegen_flags: <defaults>
</compile_context>

<pallas_src>
import jax
import jax.numpy as jnp
from jax import lax
from jax.experimental import pallas as pl
from jax.experimental.pallas import tpu as pltpu


def _round_up(x, m):
    return (x + m - 1) // m * m


def _pad2d(a, rows, cols):
    pr, pc = rows - a.shape[0], cols - a.shape[1]
    if pr == 0 and pc == 0:
        return a
    return jnp.pad(a, ((0, pr), (0, pc)))


def _fused_linear_kernel(x_ref, w_ref, sb_ref, o_ref):
    """One (tm, tn) output tile; K (reduction) is the innermost grid axis.

    x_ref : (tm, tk)  activations
    w_ref : (tn, tk)  weight in native nn.Linear (out, in) layout -- no transpose
    sb_ref: (2, tn)   row 0 = folded scale, row 1 = folded bias
    o_ref : (tm, tn)  float32 output tile, doubles as the accumulator
    """
    k = pl.program_id(2)

    @pl.when(k == 0)
    def _():
        o_ref[...] = jnp.zeros_like(o_ref)

    # Contract the shared K axis directly against the (out, in) weight tile.
    o_ref[...] += lax.dot_general(
        x_ref[...], w_ref[...],
        dimension_numbers=(((1,), (1,)), ((), ())),
        preferred_element_type=jnp.float32)

    @pl.when(k == pl.num_programs(2) - 1)
    def _():
        # Folded epilogue: y = acc * s_eff + b_eff  (scale/bias/2^-fl pre-folded).
        o_ref[...] = o_ref[...] * sb_ref[0:1, :] + sb_ref[1:2, :]


def _default_tiles(M, N, K):
    # Small-batch regime: keep all rows in one tile (8-sublane granule);
    # large batch: 256-row tiles.
    tm = _round_up(M, 8) if M <= 256 else 256
    # Lane-dense output tiles: multiples of 128, capped at 512 so double-buffered
    # tiles stay far below the v7x 64 MiB VMEM and N-blocks remain for megacore.
    tn = _round_up(N, 128) if N <= 512 else 512
    # Reduction tiles: whole (padded) K when modest (short K grid, ~0.35us/step
    # overhead), otherwise 512-wide chunks.
    tk = _round_up(K, 128) if K <= 2048 else 512
    return tm, tn, tk


def fused_linear(x, weight, bias=None, scale=1.0, dq_bias=0.0, fl=0.0,
                 tm=None, tn=None, tk=None, compute_dtype=None):
    """y = ((x @ weight.T + bias) * scale + dq_bias) * 2**(-fl)

    x:       (..., K) activations (leading dims flattened like nn.Linear)
    weight:  (N, K)   nn.Linear weight, consumed in native layout (no transpose)
    bias:    (N,)     linear bias (or None)
    scale:   scalar MulShift scale
    dq_bias: scalar MulShift bias
    fl:      fractional shift
    compute_dtype: optional MXU operand dtype (e.g. jnp.bfloat16 on v6e/v7x);
        accumulation stays float32.
    """
    lead = x.shape[:-1]
    K = x.shape[-1]
    x2 = x.reshape(-1, K)
    M = x2.shape[0]
    N, Kw = weight.shape
    assert K == Kw, (K, Kw)

    if bias is None:
        bias = jnp.zeros((N,), jnp.float32)

    # Fold the MulShift scalars, the fractional shift and the linear bias into a
    # single scale row and bias row applied in the kernel epilogue.
    scale = jnp.asarray(scale, jnp.float32).reshape(())
    dq_bias = jnp.asarray(dq_bias, jnp.float32).reshape(())
    shift = jnp.asarray(2.0 ** (-fl), jnp.float32)
    s_eff = scale * shift                                          # scalar
    b_eff = (bias.astype(jnp.float32) * scale + dq_bias) * shift   # (N,)

    dtm, dtn, dtk = _default_tiles(M, N, K)
    tm, tn, tk = tm or dtm, tn or dtn, tk or dtk
    assert tm % 8 == 0 and tn % 128 == 0 and tk % 128 == 0, (tm, tn, tk)

    Mp, Np, Kp = _round_up(M, tm), _round_up(N, tn), _round_up(K, tk)

    if compute_dtype is not None:
        x2 = x2.astype(compute_dtype)
        weight = weight.astype(compute_dtype)

    xp = _pad2d(x2, Mp, Kp)
    wp = _pad2d(weight, Np, Kp)
    sb = jnp.stack([jnp.full((N,), s_eff, jnp.float32), b_eff])    # (2, N)
    sb = _pad2d(sb, 2, Np)

    grid = (Mp // tm, Np // tn, Kp // tk)

    out = pl.pallas_call(
        _fused_linear_kernel,
        out_shape=jax.ShapeDtypeStruct((Mp, Np), jnp.float32),
        grid_spec=pltpu.PrefetchScalarGridSpec(
            num_scalar_prefetch=0,
            grid=grid,
            in_specs=[
                pl.BlockSpec((tm, tk), lambda i, j, k: (i, k)),   # x tile
                pl.BlockSpec((tn, tk), lambda i, j, k: (j, k)),   # weight (N, K) tile
                pl.BlockSpec((2, tn), lambda i, j, k: (0, j)),    # folded scale/bias
            ],
            out_specs=pl.BlockSpec((tm, tn), lambda i, j, k: (i, j)),
        ),
        compiler_params=pltpu.CompilerParams(
            dimension_semantics=("parallel", "parallel", "arbitrary"),
            # Tiles are budgeted to <~13 MiB double-buffered; 48 MiB scoped limit
            # still leaves headroom on v7x (64 MiB physical per TC).
            vmem_limit_bytes=48 * 1024 * 1024,
        ),
    )(xp, wp, sb)

    if (Mp, Np) != (M, N):
        out = out[:M, :N]
    return out.reshape(*lead, N)


if __name__ == "__main__":
    key = jax.random.PRNGKey(0)
    kx, kw, kb, kx2, kw2, kb2 = jax.random.split(key, 6)

    # Case 1: small Linear (batch=8, in=32, out=32), f32 operands.
    M, K, N = 8, 32, 32
    x = jax.random.normal(kx, (M, K), dtype=jnp.float32)
    w = jax.random.normal(kw, (N, K), dtype=jnp.float32) * 0.1
    b = jax.random.normal(kb, (N,), dtype=jnp.float32) * 0.1
    ms_scale, ms_bias, fl = 1.5, 0.25, 1.0

    out = jax.block_until_ready(fused_linear(x, w, b, ms_scale, ms_bias, fl=fl))
    ref = ((x @ w.T + b[None, :]) * ms_scale + ms_bias) * (2.0 ** (-fl))
    assert out.shape == (M, N)
    assert jnp.allclose(out, ref, atol=1e-4, rtol=1e-5), (
        f"case1 max abs err = {jnp.max(jnp.abs(out - ref))}")

    # Case 2: non-divisible shapes + leading batch dim exercise padding/slice-back.
    B2, S2, K2, N2 = 2, 3, 40, 50
    x2 = jax.random.normal(kx2, (B2, S2, K2), dtype=jnp.float32)
    w2 = jax.random.normal(kw2, (N2, K2), dtype=jnp.float32) * 0.1
    b2 = jax.random.normal(kb2, (N2,), dtype=jnp.float32) * 0.1
    out2 = jax.block_until_ready(fused_linear(x2, w2, b2, 1.0, 0.0, fl=0.0))
    ref2 = jnp.einsum('bsk,nk->bsn', x2, w2) + b2[None, None, :]
    assert out2.shape == (B2, S2, N2)
    assert jnp.allclose(out2, ref2, atol=1e-4, rtol=1e-5), (
        f"case2 max abs err = {jnp.max(jnp.abs(out2 - ref2))}")

    # Case 3: bf16 operands for the v6e/v7x MXU fast path, f32 accumulation.
    out3 = jax.block_until_ready(
        fused_linear(x, w, b, ms_scale, ms_bias, fl=fl,
                     compute_dtype=jnp.bfloat16))
    assert jnp.allclose(out3, ref, atol=5e-2, rtol=5e-2), (
        f"case3 max abs err = {jnp.max(jnp.abs(out3 - ref))}")

    print("KERNEL_OK")
</pallas_src>

<mosaic_0001>
module attributes {stable_mosaic.version = 11 : i64} {
  func.func @_fused_linear_kernel(%arg0: i32, %arg1: i32, %arg2: i32, %arg3: memref<8x128xf32, #tpu.memory_space<vmem>>, %arg4: memref<128x128xf32, #tpu.memory_space<vmem>>, %arg5: memref<2x128xf32, #tpu.memory_space<vmem>>, %arg6: memref<8x128xf32, #tpu.memory_space<vmem>>) attributes {dimension_semantics = [#tpu.dimension_semantics<parallel>, #tpu.dimension_semantics<parallel>, #tpu.dimension_semantics<arbitrary>], iteration_bounds = array<i64: 1, 1, 1>, scalar_prefetch = 0 : i64, scratch_operands = 0 : i64, tpu.core_type = #tpu.core_type<tc>, window_params = [{transform_indices = @transform_0, window_bounds = array<i64: 8, 128>}, {transform_indices = @transform_1, window_bounds = array<i64: 128, 128>}, {transform_indices = @transform_2, window_bounds = array<i64: 2, 128>}, {transform_indices = @transform_3, window_bounds = array<i64: 8, 128>}]} {
    %c0_i32 = arith.constant 0 : i32
    %0 = arith.cmpi eq, %arg2, %c0_i32 : i32
    %1 = arith.extui %0 : i1 to i32
    %c0_i32_0 = arith.constant 0 : i32
    %2 = arith.cmpi ne, %1, %c0_i32_0 : i32
    scf.if %2 {
      %cst_10 = arith.constant 0.000000e+00 : f32
      %12 = vector.broadcast %cst_10 : f32 to vector<8x128xf32>
      %c0_11 = arith.constant 0 : index
      %c0_12 = arith.constant 0 : index
      %13 = vector.load %arg6[%c0_11, %c0_12] : memref<8x128xf32, #tpu.memory_space<vmem>>, vector<8x128xf32>
      tpu.vector_store %arg6[%c0_11, %c0_12], %12 {strides = array<i32>} : memref<8x128xf32, #tpu.memory_space<vmem>>, vector<8x128xf32>,
    } else {
    }
    %c0 = arith.constant 0 : index
    %c0_1 = arith.constant 0 : index
    %3 = vector.load %arg6[%c0, %c0_1] : memref<8x128xf32, #tpu.memory_space<vmem>>, vector<8x128xf32>
    %c0_2 = arith.constant 0 : index
    %c0_3 = arith.constant 0 : index
    %4 = vector.load %arg3[%c0_2, %c0_3] : memref<8x128xf32, #tpu.memory_space<vmem>>, vector<8x128xf32>
    %c0_4 = arith.constant 0 : index
    %c0_5 = arith.constant 0 : index
    %5 = vector.load %arg4[%c0_4, %c0_5] : memref<128x128xf32, #tpu.memory_space<vmem>>, vector<128x128xf32>
    %cst = arith.constant dense<0.000000e+00> : vector<8x128xf32>
    %6 = tpu.matmul %4, %5, %cst {dimension_numbers = #tpu.dot_dimension_numbers<[1], [1], [0], [0], [0, 0, 1, 0], [], []>} : vector<8x128xf32>, vector<128x128xf32>, vector<8x128xf32> -> vector<8x128xf32>
    %7 = arith.addf %3, %6 : vector<8x128xf32>
    %c0_6 = arith.constant 0 : index
    %c0_7 = arith.constant 0 : index
    %8 = vector.load %arg6[%c0_6, %c0_7] : memref<8x128xf32, #tpu.memory_space<vmem>>, vector<8x128xf32>
    tpu.vector_store %arg6[%c0_6, %c0_7], %7 {strides = array<i32>} : memref<8x128xf32, #tpu.memory_space<vmem>>, vector<8x128xf32>,
    %c0_i32_8 = arith.constant 0 : i32
    %9 = arith.cmpi eq, %arg2, %c0_i32_8 : i32
    %10 = arith.extui %9 : i1 to i32
    %c0_i32_9 = arith.constant 0 : i32
    %11 = arith.cmpi ne, %10, %c0_i32_9 : i32
    scf.if %11 {
      %c0_10 = arith.constant 0 : index
      %c0_11 = arith.constant 0 : index
      %12 = vector.load %arg6[%c0_10, %c0_11] : memref<8x128xf32, #tpu.memory_space<vmem>>, vector<8x128xf32>
      %c0_12 = arith.constant 0 : index
      %c0_13 = arith.constant 0 : index
      %13 = vector.load %arg5[%c0_12, %c0_13] : memref<2x128xf32, #tpu.memory_space<vmem>>, vector<1x128xf32>
      %14 = vector.broadcast %13 : vector<1x128xf32> to vector<8x128xf32>
      %15 = arith.mulf %12, %14 : vector<8x128xf32>
      %c1 = arith.constant 1 : index
      %c0_14 = arith.constant 0 : index
      %16 = vector.load %arg5[%c1, %c0_14] : memref<2x128xf32, #tpu.memory_space<vmem>>, vector<1x128xf32>
      %17 = vector.broadcast %16 : vector<1x128xf32> to vector<8x128xf32>
      %18 = arith.addf %15, %17 : vector<8x128xf32>
      %c0_15 = arith.constant 0 : index
      %c0_16 = arith.constant 0 : index
      %19 = vector.load %arg6[%c0_15, %c0_16] : memref<8x128xf32, #tpu.memory_space<vmem>>, vector<8x128xf32>
      tpu.vector_store %arg6[%c0_15, %c0_16], %18 {strides = array<i32>} : memref<8x128xf32, #tpu.memory_space<vmem>>, vector<8x128xf32>,
    } else {
    }
    return
  }
  func.func @transform_0(%arg0: i32, %arg1: i32, %arg2: i32) -> (i32, i32) {
    %c0_i32 = arith.constant 0 : i32
    return %arg0, %arg2 : i32, i32
  }
  func.func @transform_1(%arg0: i32, %arg1: i32, %arg2: i32) -> (i32, i32) {
    %c0_i32 = arith.constant 0 : i32
    return %arg1, %arg2 : i32, i32
  }
  func.func @transform_2(%arg0: i32, %arg1: i32, %arg2: i32) -> (i32, i32) {
    %c0_i32 = arith.constant 0 : i32
    %c0_i32_0 = arith.constant 0 : i32
    return %c0_i32, %arg1 : i32, i32
  }
  func.func @transform_3(%arg0: i32, %arg1: i32, %arg2: i32) -> (i32, i32) {
    %c0_i32 = arith.constant 0 : i32
    return %arg0, %arg1 : i32, i32
  }
}

</mosaic_0001>

<llo_original>
// kernel: tpu_custom_call.1
$region0: #{tpu_custom_call.1}
  #allocation0 [shape = 'u32[]', space=smem, size = 0x4, offset = 0x4, fixed_abs, tag = 'smem constant byte address 0x4 - core index']
  #allocation1 [shape = 'u32[72,128]{1,0:T(1,128)}', space=vmem, size = 0x9000, scoped, tag = 'internal scratch']
  %s0 = inlined_call_operand.hbm [shape: f32[8,128], index: 0, kind: input, shape index: {}]
  %s1 = inlined_call_operand.hbm [shape: f32[128,128], index: 1, kind: input, shape index: {}]
  %s2 = inlined_call_operand.hbm [shape: f32[2,128], index: 2, kind: input, shape index: {}]
  %s3 = inlined_call_operand.hbm [shape: f32[8,128], index: 3, kind: output, shape index: {}]
  %s4 = sld [smem:[#allocation0]]
  $region42: #{tpu_custom_call.1} parent=0
    _
  %s6 = ssub.s32 1, %s4
  %s7 = scalar_select 0, %s6, %s4
  $region1: #{tpu_custom_call.1} parent=0
    #allocation2 [shape = 'u8[4096]{0}', space=vmem, size = 0x1000, scoped, tag = 'input window, operand 0, single buffered']
    #allocation3 [shape = 's32[1]{0}', space=sflag, size = 0x4, scoped, tag = 'scoped memory for tpu_custom_call.1']
    #allocation4 [shape = 's32[1]{0}', space=sflag, size = 0x4, scoped, tag = 'scoped memory for tpu_custom_call.1']
    #allocation5 [shape = 'u8[65536]{0}', space=vmem, size = 0x10000, scoped, tag = 'input window, operand 1, single buffered']
    #allocation6 [shape = 's32[1]{0}', space=sflag, size = 0x4, scoped, tag = 'scoped memory for tpu_custom_call.1']
    #allocation7 [shape = 'u8[1024]{0}', space=vmem, size = 0x400, scoped, tag = 'input window, operand 2, single buffered']
    #allocation8 [shape = 'u8[4096]{0}', space=vmem, size = 0x1000, scoped, tag = 'output window, operand 0, single buffered']
    %8 = vsyncpa [#allocation3], 0
    %9 = vsyncpa [#allocation6], 0
    %10 = vsyncpa [#allocation4], 0
    // Predicated region
    $region2: #{tpu_custom_call.1} parent=1 // pred_check
      _
    $region3: #{tpu_custom_call.1} parent=1 // pred_check_branch
      %12 = sbr.rel (0) target = $region5
    $region4: #{tpu_custom_call.1} parent=1 // pred_region
      %14 = vsyncadd [#allocation3], 0
      %s16 = sshll.u32 %s0, 4
      %s17 = int_to_ptr.hbm [resolvable:$true] %s16
      %s18 = sshll.u32 [#allocation2], 4
      %s19 = int_to_ptr.vmem [resolvable:$true] %s18
      %21 = dma.hbm_to_vmem [thread:$0]  %s17, 128, %s19, [#allocation3]
    $region5: #{tpu_custom_call.1} parent=1 // pred_fallthru
      _
    // Predicated region
    $region6: #{tpu_custom_call.1} parent=1 // pred_check
      _
    $region7: #{tpu_custom_call.1} parent=1 // pred_check_branch
      %23 = sbr.rel (0) target = $region9
    $region8: #{tpu_custom_call.1} parent=1 // pred_region
      %25 = vsyncadd [#allocation6], 0
      %s26 = sshll.u32 %s1, 4
      %s27 = int_to_ptr.hbm [resolvable:$true] %s26
      %s28 = sshll.u32 [#allocation5], 4
      %s29 = int_to_ptr.vmem [resolvable:$true] %s28
      %34 = dma.hbm_to_vmem [thread:$0]  %s27, 2048, %s29, [#allocation6], 128, 128, 8
    $region9: #{tpu_custom_call.1} parent=1 // pred_fallthru
      _
    // Predicated region
    $region10: #{tpu_custom_call.1} parent=1 // pred_check
      _
    $region11: #{tpu_custom_call.1} parent=1 // pred_check_branch
      %36 = sbr.rel (0) target = $region13
    $region12: #{tpu_custom_call.1} parent=1 // pred_region
      %38 = vsyncadd [#allocation6], 0
      %s40 = sshll.u32 %s2, 4
      %s41 = int_to_ptr.hbm [resolvable:$true] %s40
      %s42 = sshll.u32 [#allocation7], 4
      %s43 = int_to_ptr.vmem [resolvable:$true] %s42
      %45 = dma.hbm_to_vmem [thread:$0]  %s41, 32, %s43, [#allocation6]
    $region13: #{tpu_custom_call.1} parent=1 // pred_fallthru
      _
    // Predicated region
    $region14: #{tpu_custom_call.1} parent=1 // pred_check
      _
    $region15: #{tpu_custom_call.1} parent=1 // pred_check_branch
      %47 = sbr.rel (0) target = $region17
    $region16: #{tpu_custom_call.1} parent=1 // pred_region
      %49 = dma.done [#allocation3], 128
    $region17: #{tpu_custom_call.1} parent=1 // pred_fallthru
      _
    // Predicated region
    $region18: #{tpu_custom_call.1} parent=1 // pred_check
      _
    $region19: #{tpu_custom_call.1} parent=1 // pred_check_branch
      %51 = sbr.rel (0) target = $region21
    $region20: #{tpu_custom_call.1} parent=1 // pred_region
      %53 = dma.done [#allocation6], 2048
    $region21: #{tpu_custom_call.1} parent=1 // pred_fallthru
      _
    // Predicated region
    $region22: #{tpu_custom_call.1} parent=1 // pred_check
      _
    $region23: #{tpu_custom_call.1} parent=1 // pred_check_branch
      %55 = sbr.rel (0) target = $region25
    $region24: #{tpu_custom_call.1} parent=1 // pred_region
      %57 = dma.done [#allocation6], 32
    $region25: #{tpu_custom_call.1} parent=1 // pred_fallthru
      _
    %p58 = scmp.eq.s32.totalorder 0, 0
    // Predicated region
    $region26: #{tpu_custom_call.1} parent=1 // pred_check
      %p59 = pneg %p58
    $region27: #{tpu_custom_call.1} parent=1 // pred_check_branch
      %61 = sbr.rel (%p59) target = $region29
    $region28: #{tpu_custom_call.1} parent=1 // pred_region
      %62 = vst [vmem:[#allocation8] sm:$0xff] 0.0
    $region29: #{tpu_custom_call.1} parent=1 // pred_fallthru
      _
    %v63 = vld [vmem:[#allocation8] sm:$0xff]
    %v64 = vld [vmem:[#allocation2] sm:$0xff]
    %v65 = vld [vmem:[#allocation5] sm:$0xff]
    %v66 = vld [vmem:[#allocation5 + $0x8] sm:$0xff]
    %v67 = vld [vmem:[#allocation5 + $0x10] sm:$0xff]
    %v68 = vld [vmem:[#allocation5 + $0x18] sm:$0xff]
    %v69 = vld [vmem:[#allocation5 + $0x20] sm:$0xff]
    %v70 = vld [vmem:[#allocation5 + $0x28] sm:$0xff]
    %v71 = vld [vmem:[#allocation5 + $0x30] sm:$0xff]
    %v72 = vld [vmem:[#allocation5 + $0x38] sm:$0xff]
    %v73 = vld [vmem:[#allocation5 + $0x40] sm:$0xff]
    %v74 = vld [vmem:[#allocation5 + $0x48] sm:$0xff]
    %v75 = vld [vmem:[#allocation5 + $0x50] sm:$0xff]
    %v76 = vld [vmem:[#allocation5 + $0x58] sm:$0xff]
    %v77 = vld [vmem:[#allocation5 + $0x60] sm:$0xff]
    %v78 = vld [vmem:[#allocation5 + $0x68] sm:$0xff]
    %v79 = vld [vmem:[#allocation5 + $0x70] sm:$0xff]
    %v80 = vld [vmem:[#allocation5 + $0x78] sm:$0xff]
    %81 = vmatpush.xpose.msra.mxu0 %v80
    %82 = vmatpush.xpose.msra.mxu0 %v79
    %83 = vmatpush.xpose.msra.mxu0 %v78
    %84 = vmatpush.xpose.msra.mxu0 %v77
    %85 = vmatpush.xpose.msra.mxu0 %v76
    %86 = vmatpush.xpose.msra.mxu0 %v75
    %87 = vmatpush.xpose.msra.mxu0 %v74
    %88 = vmatpush.xpose.msra.mxu0 %v73
    %89 = vmatpush.xpose.msra.mxu0 %v72
    %90 = vmatpush.xpose.msra.mxu0 %v71
    %91 = vmatpush.xpose.msra.mxu0 %v70
    %92 = vmatpush.xpose.msra.mxu0 %v69
    %93 = vmatpush.xpose.msra.mxu0 %v68
    %94 = vmatpush.xpose.msra.mxu0 %v67
    %95 = vmatpush.xpose.msra.mxu0 %v66
    %96 = vmatpush.xpose.msra.mxu0 %v65
    %97 = vmatmul.f32.gmra.mxu0 %v64
    %v98 = vpop.f32.mrf.mxu0
    %v99 = vadd.f32 0.0, %v98
    %100 = vdwg.mxu0
    %v101 = vadd.f32 %v63, %v99
    %102 = vst [vmem:[#allocation8] sm:$0xff] %v101
    // Predicated region
    $region30: #{tpu_custom_call.1} parent=1 // pred_check
      %p103 = pneg %p58
    $region31: #{tpu_custom_call.1} parent=1 // pred_check_branch
      %105 = sbr.rel (%p103) target = $region33
    $region32: #{tpu_custom_call.1} parent=1 // pred_region
      %v106 = vld [vmem:[#allocation8] sm:$0xff]
      %v107 = vld [vmem:[#allocation7] sm:$0x1]
      %v108 = vperm.slane %v107, 0
      %v109 = vmul.f32 %v106, %v108
      %v110 = vld [vmem:[#allocation7 + $0x1] sm:$0x1]
      %v111 = vperm.slane %v110, 0
      %v112 = vadd.f32 %v109, %v111
      %113 = vst [vmem:[#allocation8] sm:$0xff] %v112
    $region33: #{tpu_custom_call.1} parent=1 // pred_fallthru
      _
    // Predicated region
    $region34: #{tpu_custom_call.1} parent=1 // pred_check
      _
    $region35: #{tpu_custom_call.1} parent=1 // pred_check_branch
      %115 = sbr.rel (0) target = $region37
    $region36: #{tpu_custom_call.1} parent=1 // pred_region
      %117 = vsyncadd [#allocation4], 0
      %s119 = sshll.u32 [#allocation8], 4
      %s120 = int_to_ptr.vmem [resolvable:$true] %s119
      %s121 = sshll.u32 %s3, 4
      %s122 = int_to_ptr.hbm [resolvable:$true] %s121
      %124 = dma.vmem_to_hbm [thread:$0]  %s120, 128, %s122, [#allocation4]
    $region37: #{tpu_custom_call.1} parent=1 // pred_fallthru
      _
    // Predicated region
    $region38: #{tpu_custom_call.1} parent=1 // pred_check
      _
    $region39: #{tpu_custom_call.1} parent=1 // pred_check_branch
      %126 = sbr.rel (0) target = $region41
    $region40: #{tpu_custom_call.1} parent=1 // pred_region
      %128 = dma.done [#allocation4], 128
    $region41: #{tpu_custom_call.1} parent=1 // pred_fallthru
      _
    %129 = vsyncpa [#allocation3], 1
    %130 = vsyncpa [#allocation6], 1
    %131 = vsyncpa [#allocation4], 1

</llo_original>
